<compile_context>
chip_gen: v6e
topology: v6e:2x2x1
jax: 0.10.0
libtpu: 0.0.40
codegen_flags: <defaults>
</compile_context>

<pallas_src>
import math

import jax
import jax.numpy as jnp
from jax.experimental import pallas as pl
from jax.experimental.pallas import tpu as pltpu


def _round_up(x, m):
    return ((x + m - 1) // m) * m


def _feature_gate_kernel(main_ref, branch_ref, gm_ref, gb_ref, out_ref):
    # main/branch/out: (TILE_R, F2) tiles; gm/gb: (1, F2) f32 rows broadcast
    # along the sublane axis.  FMA in f32, cast once at the store.
    m = main_ref[...].astype(jnp.float32)
    b = branch_ref[...].astype(jnp.float32)
    out_ref[...] = (m * gm_ref[...] + b * gb_ref[...]).astype(out_ref.dtype)


def _vmem_capacity_bytes():
    try:
        return int(pltpu.get_tpu_info().vmem_capacity_bytes)
    except Exception:  # non-TPU / interpret fallback: assume smallest (v7x, 64 MiB)
        return 64 * 1024 * 1024


def feature_gate(main, branch, gate_main, gate_branch):
    """main, branch: (B, S, F); gate_main, gate_branch: (F,)."""
    B, S, F = main.shape
    out_dtype = jnp.result_type(main.dtype, branch.dtype,
                                gate_main.dtype, gate_branch.dtype)
    m_it = jnp.dtype(main.dtype).itemsize
    b_it = jnp.dtype(branch.dtype).itemsize
    o_it = jnp.dtype(out_dtype).itemsize
    R = B * S
    total_bytes = R * F * (m_it + b_it + o_it)

    # Tiny tensors: per-call fixed cost (grid setup, DMA descriptors) dominates;
    # let XLA fuse the plain broadcast expression instead.
    if total_bytes < 256 * 1024:
        return main * gate_main[None, None] + branch * gate_branch[None, None]

    # ---- Lane-dense folding (pure reshape, never pads) --------------------
    # Fold adjacent rows into the lane axis so the last dim is a multiple of
    # 128 (unmasked full-width vector stores), widened up to ~512 lanes.
    fold = 1
    if F % 128 != 0:
        lcm = math.lcm(F, 128)
        if lcm <= 1024 and R % (lcm // F) == 0:
            fold = lcm // F
    F2 = F * fold
    while F2 % 128 == 0 and F2 < 512 and R % (fold * 2) == 0:
        fold *= 2
        F2 *= 2
    R2 = R // fold

    main2 = main.reshape(R2, F2)
    branch2 = branch.reshape(R2, F2)
    gm = jnp.tile(gate_main.astype(jnp.float32).reshape(1, F), (1, fold))    # (1, F2)
    gb = jnp.tile(gate_branch.astype(jnp.float32).reshape(1, F), (1, fold))  # (1, F2)

    # ---- Row-tile size from a generation-aware VMEM budget -----------------
    vmem_cap = _vmem_capacity_bytes()
    # ~38 MiB of double-buffered blocks on v7x (64 MiB VMEM), 56 MiB on v5e/v6e.
    budget = min(int(vmem_cap * 0.6), 56 * 1024 * 1024)
    per_row = F2 * (m_it + b_it + o_it) * 2          # x2 buffers, per-array dtypes
    tile_r = max(16, (budget // per_row) // 16 * 16)
    if tile_r >= R2:
        tile_r = R2                                   # full-extent block is allowed
    # Keep >= ~8 grid steps when there is enough work, so v7x can shard the
    # "parallel" axis across both TensorCores (>=4 steps each).
    if R2 > 8 * 16 and pl.cdiv(R2, tile_r) < 8:
        tile_r = max(16, _round_up(pl.cdiv(R2, 8), 16))

    grid = (pl.cdiv(R2, tile_r),)   # ragged final block: masked write-back, no padding

    vmem_used = 2 * tile_r * F2 * (m_it + b_it + o_it) + 4 * F2 * 4   # blocks + gates
    vmem_limit = min(vmem_cap, max(vmem_used + 8 * 1024 * 1024, 16 * 1024 * 1024))

    out2 = pl.pallas_call(
        _feature_gate_kernel,
        out_shape=jax.ShapeDtypeStruct((R2, F2), out_dtype),
        grid_spec=pltpu.PrefetchScalarGridSpec(
            num_scalar_prefetch=0,
            grid=grid,
            in_specs=[
                pl.BlockSpec((tile_r, F2), lambda r: (r, 0)),
                pl.BlockSpec((tile_r, F2), lambda r: (r, 0)),
                # Gates: constant index_map -> stay resident across the grid.
                pl.BlockSpec((1, F2), lambda r: (0, 0)),
                pl.BlockSpec((1, F2), lambda r: (0, 0)),
            ],
            out_specs=pl.BlockSpec((tile_r, F2), lambda r: (r, 0)),
        ),
        compiler_params=pltpu.CompilerParams(
            dimension_semantics=("parallel",),
            vmem_limit_bytes=int(vmem_limit),
        ),
        cost_estimate=pl.CostEstimate(
            flops=3 * R * F,
            transcendentals=0,
            bytes_accessed=R * F * (m_it + b_it + o_it),
        ),
    )(main2, branch2, gm, gb)

    return out2.reshape(B, S, F)


if __name__ == "__main__":
    INIT_MAIN_FRAC = 0.9  # matches FeatureGate.init_main_frac

    def make_inputs(key, B, S, F, dtype):
        k1, k2 = jax.random.split(key)
        main = jax.random.normal(k1, (B, S, F), dtype=jnp.float32).astype(dtype)
        branch = jax.random.normal(k2, (B, S, F), dtype=jnp.float32).astype(dtype)
        gm = jnp.ones((F,), jnp.float32) * INIT_MAIN_FRAC
        gb = jnp.ones((F,), jnp.float32) * (1.0 - INIT_MAIN_FRAC)
        return main, branch, gm, gb

    cases = [
        ((2, 8, 32), jnp.float32),      # tiny -> plain-JAX fallback path
        ((2, 640, 96), jnp.float32),    # lane-folded Pallas path (F2 = 768)
        ((3, 137, 160), jnp.bfloat16),  # un-foldable F, ragged grid, bf16 inputs
    ]
    keys = jax.random.split(jax.random.PRNGKey(0), len(cases))
    for (shape, dtype), k in zip(cases, keys):
        B, S, F = shape
        main, branch, gm, gb = make_inputs(k, B, S, F, dtype)
        out = jax.block_until_ready(feature_gate(main, branch, gm, gb))
        ref = main * gm[None, None] + branch * gb[None, None]
        assert out.shape == ref.shape, (out.shape, ref.shape)
        assert out.dtype == ref.dtype, (out.dtype, ref.dtype)
        assert jnp.allclose(out, ref, atol=1e-5, rtol=1e-5), f"mismatch for {shape} {dtype}"

    print("KERNEL_OK")
</pallas_src>

<mosaic_0001>
module attributes {stable_mosaic.version = 11 : i64} {
  func.func @_feature_gate_kernel(%arg0: i32, %arg1: memref<32x768xf32, #tpu.memory_space<vmem>>, %arg2: memref<32x768xf32, #tpu.memory_space<vmem>>, %arg3: memref<1x768xf32, #tpu.memory_space<vmem>>, %arg4: memref<1x768xf32, #tpu.memory_space<vmem>>, %arg5: memref<32x768xf32, #tpu.memory_space<vmem>>) attributes {dimension_semantics = [#tpu.dimension_semantics<parallel>], iteration_bounds = array<i64: 5>, scalar_prefetch = 0 : i64, scratch_operands = 0 : i64, tpu.core_type = #tpu.core_type<tc>, window_params = [{transform_indices = @transform_0, window_bounds = array<i64: 32, 768>}, {transform_indices = @transform_1, window_bounds = array<i64: 32, 768>}, {pipeline_mode = #tpu.pipeline_mode<synchronous>, transform_indices = @transform_2, window_bounds = array<i64: 1, 768>}, {pipeline_mode = #tpu.pipeline_mode<synchronous>, transform_indices = @transform_3, window_bounds = array<i64: 1, 768>}, {transform_indices = @transform_4, window_bounds = array<i64: 32, 768>}]} {
    %c0 = arith.constant 0 : index
    %c0_0 = arith.constant 0 : index
    %0 = vector.load %arg1[%c0, %c0_0] : memref<32x768xf32, #tpu.memory_space<vmem>>, vector<32x768xf32>
    %c0_1 = arith.constant 0 : index
    %c0_2 = arith.constant 0 : index
    %1 = vector.load %arg2[%c0_1, %c0_2] : memref<32x768xf32, #tpu.memory_space<vmem>>, vector<32x768xf32>
    %c0_3 = arith.constant 0 : index
    %c0_4 = arith.constant 0 : index
    %2 = vector.load %arg3[%c0_3, %c0_4] : memref<1x768xf32, #tpu.memory_space<vmem>>, vector<1x768xf32>
    %3 = vector.broadcast %2 : vector<1x768xf32> to vector<32x768xf32>
    %4 = arith.mulf %0, %3 : vector<32x768xf32>
    %c0_5 = arith.constant 0 : index
    %c0_6 = arith.constant 0 : index
    %5 = vector.load %arg4[%c0_5, %c0_6] : memref<1x768xf32, #tpu.memory_space<vmem>>, vector<1x768xf32>
    %6 = vector.broadcast %5 : vector<1x768xf32> to vector<32x768xf32>
    %7 = arith.mulf %1, %6 : vector<32x768xf32>
    %8 = arith.addf %4, %7 : vector<32x768xf32>
    %c0_7 = arith.constant 0 : index
    %c0_8 = arith.constant 0 : index
    %9 = vector.load %arg5[%c0_7, %c0_8] : memref<32x768xf32, #tpu.memory_space<vmem>>, vector<32x768xf32>
    tpu.vector_store %arg5[%c0_7, %c0_8], %8 {strides = array<i32>} : memref<32x768xf32, #tpu.memory_space<vmem>>, vector<32x768xf32>,
    return
  }
  func.func @transform_0(%arg0: i32) -> (i32, i32) {
    %c0_i32 = arith.constant 0 : i32
    %c0_i32_0 = arith.constant 0 : i32
    return %arg0, %c0_i32 : i32, i32
  }
  func.func @transform_1(%arg0: i32) -> (i32, i32) {
    %c0_i32 = arith.constant 0 : i32
    %c0_i32_0 = arith.constant 0 : i32
    return %arg0, %c0_i32 : i32, i32
  }
  func.func @transform_2(%arg0: i32) -> (i32, i32) {
    %c0_i32 = arith.constant 0 : i32
    %c0_i32_0 = arith.constant 0 : i32
    %c0_i32_1 = arith.constant 0 : i32
    return %c0_i32, %c0_i32_0 : i32, i32
  }
  func.func @transform_3(%arg0: i32) -> (i32, i32) {
    %c0_i32 = arith.constant 0 : i32
    %c0_i32_0 = arith.constant 0 : i32
    %c0_i32_1 = arith.constant 0 : i32
    return %c0_i32, %c0_i32_0 : i32, i32
  }
  func.func @transform_4(%arg0: i32) -> (i32, i32) {
    %c0_i32 = arith.constant 0 : i32
    %c0_i32_0 = arith.constant 0 : i32
    return %arg0, %c0_i32 : i32, i32
  }
}

</mosaic_0001>

<llo_original>
// kernel: tpu_custom_call.1
$region0: #{tpu_custom_call.1}
  #allocation0 [shape = 'u32[]', space=smem, size = 0x4, offset = 0x4, fixed_abs, tag = 'smem constant byte address 0x4 - core index']
  #allocation1 [shape = 'u32[144,128]{1,0:T(1,128)}', space=vmem, size = 0x12000, scoped, tag = 'internal scratch']
  %s0 = inlined_call_operand.hbm [shape: f32[160,768], index: 0, kind: input, shape index: {}]
  %s1 = inlined_call_operand.hbm [shape: f32[160,768], index: 1, kind: input, shape index: {}]
  %s2 = inlined_call_operand.hbm [shape: f32[1,768], index: 2, kind: input, shape index: {}]
  %s3 = inlined_call_operand.hbm [shape: f32[1,768], index: 3, kind: input, shape index: {}]
  %s4 = inlined_call_operand.hbm [shape: f32[160,768], index: 4, kind: output, shape index: {}]
  %s5 = sld [smem:[#allocation0]]
  $region65: #{tpu_custom_call.1} parent=0
    _
  %s7 = ssub.s32 1, %s5
  %s8 = scalar_select 0, %s7, %s5
  $region1: #{tpu_custom_call.1} parent=0
    #allocation2 [shape = 'u8[196608]{0}', space=vmem, size = 0x30000, scoped, tag = 'input window, operand 0']
    #allocation3 [shape = 's32[2]{0}', space=sflag, size = 0x8, scoped, tag = 'scoped memory for tpu_custom_call.1']
    #allocation4 [shape = 's32[2]{0}', space=sflag, size = 0x8, scoped, tag = 'scoped memory for tpu_custom_call.1']
    #allocation5 [shape = 'u8[196608]{0}', space=vmem, size = 0x30000, scoped, tag = 'input window, operand 1']
    #allocation6 [shape = 's32[2]{0}', space=sflag, size = 0x8, scoped, tag = 'scoped memory for tpu_custom_call.1']
    #allocation7 [shape = 'u8[3072]{0}', space=vmem, size = 0xc00, scoped, tag = 'input window, operand 2, single buffered']
    #allocation8 [shape = 'u8[3072]{0}', space=vmem, size = 0xc00, scoped, tag = 'input window, operand 3, single buffered']
    #allocation9 [shape = 's32[1]{0}', space=sflag, size = 0x4, scoped, tag = 'scoped memory for tpu_custom_call.1']
    #allocation10 [shape = 'u8[196608]{0}', space=vmem, size = 0x30000, scoped, tag = 'output window, operand 0']
    %9 = vsyncpa [#allocation3], 0
    %s10 = scalar_lea.sflag [#allocation3], 1
    %11 = vsyncpa %s10, 0
    %12 = vsyncpa [#allocation6], 0
    %s13 = scalar_lea.sflag [#allocation6], 1
    %14 = vsyncpa %s13, 0
    %15 = vsyncpa [#allocation9], 0
    %16 = vsyncpa [#allocation4], 0
    %s17 = scalar_lea.sflag [#allocation4], 1
    %18 = vsyncpa %s17, 0
    loop: start=0, step=1, limit=7
    $region2: #{tpu_custom_call.1} parent=1 // loop_pre_header
      _
    $region3: #{tpu_custom_call.1} parent=1 // loop_header
      %s20 = sphi 0, %s24
      %p21 = scmp.ge.s32.totalorder %s20, 7
      %s30 = sphi 0, %s32
      %s33 = sphi 0, %s30
      %s34 = sphi 0, %s33
      %s50 = sphi 0, %s34
      %s56 = sphi 0, %s58
      %s59 = sphi 0, %s56
      %s60 = sphi 0, %s59
      %s76 = sphi 0, %s60
      %s80 = sphi 0, %s80
      %s82 = sphi 0, %s80
      %s83 = sphi 0, %s82
      %s97 = sphi 0, %s83
      %s101 = sphi 0, %s101
      %s103 = sphi 0, %s101
      %s104 = sphi 0, %s103
      %s118 = sphi 0, %s104
      %s124 = sphi 0, %s126
      %s127 = sphi 0, %s124
      %s128 = sphi 0, %s127
      %s144 = sphi 0, %s128
    $region4: #{tpu_custom_call.1} parent=1 // loop_header_branch
      %23 = sbr.rel (%p21) target = $region8
    $region5: #{tpu_custom_call.1} parent=1 // loop_body
      %s25 = ssub.s32 %s20, 1
      %s26 = ssub.s32 %s20, 2
      %s27 = sadd.s32 %s20, 1
      %s28 = ssub.s32 %s20, %s27
      %p29 = scmp.eq.s32.totalorder %s28, 0
      %s31 = sadd.s32 %s30, 1
      %s32 = scalar_select %p29, %s30, %s31
      %p35 = pneg %p29
      %p36 = scmp.eq.s32.totalorder %s20, 4
      %p37 = por %p35, %p36
      %p38 = scmp.ne.s32.totalorder %s30, %s33
      %p39 = scmp.eq.s32.totalorder %s20, 0
      %p40 = por %p38, %p39
      %p41 = scmp.ne.s32.totalorder %s30, %s33
      %p42 = scmp.eq.s32.totalorder %s25, 4
      %p43 = por %p41, %p42
      %p44 = scmp.ne.s32.totalorder %s33, %s34
      %p45 = scmp.eq.s32.totalorder %s25, 0
      %p46 = por %p44, %p45
      %p47 = scmp.ne.s32.totalorder %s33, %s34
      %p48 = scmp.eq.s32.totalorder %s26, 4
      %p49 = por %p47, %p48
      %p51 = scmp.ne.s32.totalorder %s34, %s50
      %p52 = scmp.eq.s32.totalorder %s26, 0
      %p53 = por %p51, %p52
      %s54 = ssub.s32 %s20, %s27
      %p55 = scmp.eq.s32.totalorder %s54, 0
      %s57 = sadd.s32 %s56, 1
      %s58 = scalar_select %p55, %s56, %s57
      %p61 = pneg %p55
      %p62 = scmp.eq.s32.totalorder %s20, 4
      %p63 = por %p61, %p62
      %p64 = scmp.ne.s32.totalorder %s56, %s59
      %p65 = scmp.eq.s32.totalorder %s20, 0
      %p66 = por %p64, %p65
      %p67 = scmp.ne.s32.totalorder %s56, %s59
      %p68 = scmp.eq.s32.totalorder %s25, 4
      %p69 = por %p67, %p68
      %p70 = scmp.ne.s32.totalorder %s59, %s60
      %p71 = scmp.eq.s32.totalorder %s25, 0
      %p72 = por %p70, %p71
      %p73 = scmp.ne.s32.totalorder %s59, %s60
      %p74 = scmp.eq.s32.totalorder %s26, 4
      %p75 = por %p73, %p74
      %p77 = scmp.ne.s32.totalorder %s60, %s76
      %p78 = scmp.eq.s32.totalorder %s26, 0
      %p79 = por %p77, %p78
      %s81 = sadd.s32 %s80, 1
      %p84 = scmp.eq.s32.totalorder %s20, 4
      %p85 = scmp.ne.s32.totalorder %s80, %s82
      %p86 = scmp.eq.s32.totalorder %s20, 0
      %p87 = por %p85, %p86
      %p88 = scmp.ne.s32.totalorder %s80, %s82
      %p89 = scmp.eq.s32.totalorder %s25, 4
      %p90 = por %p88, %p89
      %p91 = scmp.ne.s32.totalorder %s82, %s83
      %p92 = scmp.eq.s32.totalorder %s25, 0
      %p93 = por %p91, %p92
      %p94 = scmp.ne.s32.totalorder %s82, %s83
      %p95 = scmp.eq.s32.totalorder %s26, 4
      %p96 = por %p94, %p95
      %p98 = scmp.ne.s32.totalorder %s83, %s97
      %p99 = scmp.eq.s32.totalorder %s26, 0
      %p100 = por %p98, %p99
      %s102 = sadd.s32 %s101, 1
      %p105 = scmp.eq.s32.totalorder %s20, 4
      %p106 = scmp.ne.s32.totalorder %s101, %s103
      %p107 = scmp.eq.s32.totalorder %s20, 0
      %p108 = por %p106, %p107
      %p109 = scmp.ne.s32.totalorder %s101, %s103
      %p110 = scmp.eq.s32.totalorder %s25, 4
      %p111 = por %p109, %p110
      %p112 = scmp.ne.s32.totalorder %s103, %s104
      %p113 = scmp.eq.s32.totalorder %s25, 0
      %p114 = por %p112, %p113
      %p115 = scmp.ne.s32.totalorder %s103, %s104
      %p116 = scmp.eq.s32.totalorder %s26, 4
      %p117 = por %p115, %p116
      %p119 = scmp.ne.s32.totalorder %s104, %s118
      %p120 = scmp.eq.s32.totalorder %s26, 0
      %p121 = por %p119, %p120
      %s122 = ssub.s32 %s20, %s27
      %p123 = scmp.eq.s32.totalorder %s122, 0
      %s125 = sadd.s32 %s124, 1
      %s126 = scalar_select %p123, %s124, %s125
      %p129 = pneg %p123
      %p130 = scmp.eq.s32.totalorder %s20, 4
      %p131 = por %p129, %p130
      %p132 = scmp.ne.s32.totalorder %s124, %s127
      %p133 = scmp.eq.s32.totalorder %s20, 0
      %p134 = por %p132, %p133
      %p135 = scmp.ne.s32.totalorder %s124, %s127
      %p136 = scmp.eq.s32.totalorder %s25, 4
      %p137 = por %p135, %p136
      %p138 = scmp.ne.s32.totalorder %s127, %s128
      %p139 = scmp.eq.s32.totalorder %s25, 0
      %p140 = por %p138, %p139
      %p141 = scmp.ne.s32.totalorder %s127, %s128
      %p142 = scmp.eq.s32.totalorder %s26, 4
      %p143 = por %p141, %p142
      %p145 = scmp.ne.s32.totalorder %s128, %s144
      %p146 = scmp.eq.s32.totalorder %s26, 0
      %p147 = por %p145, %p146
      %p148 = scmp.le.s32.totalorder 1, %s20
      %p149 = scmp.lt.s32.totalorder %s20, 6
      %p150 = pnand %p148, %p149
      %p151 = pneg %p150
      // Predicated region
      $region9: #{tpu_custom_call.1} parent=5 // pred_check
        _
      $region10: #{tpu_custom_call.1} parent=5 // pred_check_branch
        %153 = sbr.rel (%p150) target = $region12
      $region11: #{tpu_custom_call.1} parent=5 // pred_region
        %s154 = ssub.s32 %s20, 1
        // Predicated region
        $region13: #{tpu_custom_call.1} parent=11 // pred_check
          %p155 = pneg %p93
        $region14: #{tpu_custom_call.1} parent=11 // pred_check_branch
          %157 = sbr.rel (%p155) target = $region16
        $region15: #{tpu_custom_call.1} parent=11 // pred_region
          %s159 = ssub.s32 96, 96
          %160 = vsyncadd [#allocation6], %s159
          %s162 = sshll.u32 [#allocation7], 4
          %s163 = int_to_ptr.vmem [resolvable:$true] %s162
          %165 = dma.hbm_to_vmem [thread:$0]  %s2, 96, %s163, [#allocation6]
        $region16: #{tpu_custom_call.1} parent=11 // pred_fallthru
          _
        // Predicated region
        $region17: #{tpu_custom_call.1} parent=11 // pred_check
          %p166 = pneg %p114
        $region18: #{tpu_custom_call.1} parent=11 // pred_check_branch
          %168 = sbr.rel (%p166) target = $region20
        $region19: #{tpu_custom_call.1} parent=11 // pred_region
          %s170 = ssub.s32 96, 96
          %171 = vsyncadd [#allocation9], %s170
          %s173 = sshll.u32 [#allocation8], 4
          %s174 = int_to_ptr.vmem [resolvable:$true] %s173
          %176 = dma.hbm_to_vmem [thread:$0]  %s3, 96, %s174, [#allocation9]
        $region20: #{tpu_custom_call.1} parent=11 // pred_fallthru
          _
      $region12: #{tpu_custom_call.1} parent=5 // pred_fallthru
        _
      %p177 = scmp.lt.s32.totalorder %s20, 5
      // Predicated region
      $region21: #{tpu_custom_call.1} parent=5 // pred_check
        %p178 = pneg %p177
      $region22: #{tpu_custom_call.1} parent=5 // pred_check_branch
        %180 = sbr.rel (%p178) target = $region24
      $region23: #{tpu_custom_call.1} parent=5 // pred_region
        // Predicated region
        $region25: #{tpu_custom_call.1} parent=23 // pred_check
          %p181 = pneg %p40
        $region26: #{tpu_custom_call.1} parent=23 // pred_check_branch
          %183 = sbr.rel (%p181) target = $region28
        $region27: #{tpu_custom_call.1} parent=23 // pred_region
          %s184 = sand.u32 %s30, 1
          %s185 = scalar_lea.sflag [#allocation3], %s184
          %s186 = sand.u32 %s30, 1
          %s187 = smul.addr %s186, 192
          %s188 = scalar_lea.vmem [#allocation2], %s187
          %s189 = smul.u32 4, %s20
          %s191 = ssub.s32 3072, 3072
          %192 = vsyncadd %s185, %s191
          %s193 = smul.addr %s189, 6
          %s194 = smul.addr %s193, 128
          %s195 = scalar_lea.hbm %s0, %s194
          %s196 = sshll.u32 %s188, 4
          %s197 = int_to_ptr.vmem [resolvable:$true] %s196
          %202 = dma.hbm_to_vmem [thread:$0]  %s195, 3072, %s197, %s185, 768, 768, 48
        $region28: #{tpu_custom_call.1} parent=23 // pred_fallthru
          _
        // Predicated region
        $region29: #{tpu_custom_call.1} parent=23 // pred_check
          %p203 = pneg %p66
        $region30: #{tpu_custom_call.1} parent=23 // pred_check_branch
          %205 = sbr.rel (%p203) target = $region32
        $region31: #{tpu_custom_call.1} parent=23 // pred_region
          %s206 = sand.u32 %s20, 1
          %s207 = scalar_lea.sflag [#allocation6], %s206
          %s208 = sand.u32 %s56, 1
          %s209 = smul.addr %s208, 192
          %s210 = scalar_lea.vmem [#allocation5], %s209
          %s211 = smul.u32 4, %s20
          %s213 = ssub.s32 3072, 3072
          %214 = vsyncadd %s207, %s213
          %s215 = smul.addr %s211, 6
          %s216 = smul.addr %s215, 128
          %s217 = scalar_lea.hbm %s1, %s216
          %s218 = sshll.u32 %s210, 4
          %s219 = int_to_ptr.vmem [resolvable:$true] %s218
          %224 = dma.hbm_to_vmem [thread:$0]  %s217, 3072, %s219, %s207, 768, 768, 48
        $region32: #{tpu_custom_call.1} parent=23 // pred_fallthru
          _
      $region24: #{tpu_custom_call.1} parent=5 // pred_fallthru
        _
      %p225 = scmp.le.s32.totalorder 1, %s20
      %p226 = scmp.lt.s32.totalorder %s20, 6
      %p227 = pnand %p225, %p226
      %p228 = pneg %p227
      // Predicated region
      $region33: #{tpu_custom_call.1} parent=5 // pred_check
        _
      $region34: #{tpu_custom_call.1} parent=5 // pred_check_branch
        %230 = sbr.rel (%p227) target = $region36
      $region35: #{tpu_custom_call.1} parent=5 // pred_region
        %s231 = ssub.s32 %s20, 1
        %s232 = sand.u32 %s33, 1
        %s233 = scalar_lea.sflag [#allocation3], %s232
        %s234 = sand.u32 %s33, 1
        %s235 = smul.addr %s234, 192
        %s236 = scalar_lea.vmem [#allocation2], %s235
        // Predicated region
        $region37: #{tpu_custom_call.1} parent=35 // pred_check
          %p237 = pneg %p46
        $region38: #{tpu_custom_call.1} parent=35 // pred_check_branch
          %239 = sbr.rel (%p237) target = $region40
        $region39: #{tpu_custom_call.1} parent=35 // pred_region
          %240 = dma.done %s233, 3072
        $region40: #{tpu_custom_call.1} parent=35 // pred_fallthru
          _
        %s241 = sand.u32 %s25, 1
        %s242 = scalar_lea.sflag [#allocation6], %s241
        %s243 = sand.u32 %s59, 1
        %s244 = smul.addr %s243, 192
        %s245 = scalar_lea.vmem [#allocation5], %s244
        // Predicated region
        $region41: #{tpu_custom_call.1} parent=35 // pred_check
          %p246 = pneg %p72
        $region42: #{tpu_custom_call.1} parent=35 // pred_check_branch
          %248 = sbr.rel (%p246) target = $region44
        $region43: #{tpu_custom_call.1} parent=35 // pred_region
          %249 = dma.done %s242, 3072
        $region44: #{tpu_custom_call.1} parent=35 // pred_fallthru
          _
        // Predicated region
        $region45: #{tpu_custom_call.1} parent=35 // pred_check
          %p250 = pneg %p93
        $region46: #{tpu_custom_call.1} parent=35 // pred_check_branch
          %252 = sbr.rel (%p250) target = $region48
        $region47: #{tpu_custom_call.1} parent=35 // pred_region
          %253 = dma.done [#allocation6], 96
        $region48: #{tpu_custom_call.1} parent=35 // pred_fallthru
          _
        // Predicated region
        $region49: #{tpu_custom_call.1} parent=35 // pred_check
          %p254 = pneg %p114
        $region50: #{tpu_custom_call.1} parent=35 // pred_check_branch
          %256 = sbr.rel (%p254) target = $region52
        $region51: #{tpu_custom_call.1} parent=35 // pred_region
          %257 = dma.done [#allocation9], 96
        $region52: #{tpu_custom_call.1} parent=35 // pred_fallthru
          _
        %s258 = sand.u32 %s33, 1
        %s259 = scalar_lea.sflag [#allocation3], %s258
        %s260 = sand.u32 %s33, 1
        %s261 = smul.addr %s260, 192
        %s262 = scalar_lea.vmem [#allocation2], %s261
        %p263 = pneg %p46
        %p264 = pneg %p43
        %s265 = sand.u32 %s25, 1
        %s266 = scalar_lea.sflag [#allocation6], %s265
        %s267 = sand.u32 %s59, 1
        %s268 = smul.addr %s267, 192
        %s269 = scalar_lea.vmem [#allocation5], %s268
        %p270 = pneg %p72
        %p271 = pneg %p69
        %p272 = pneg %p93
        %p273 = pneg %p90
        %p274 = pneg %p114
        %p275 = pneg %p111
        %p276 = pneg %p140
        %p277 = pneg %p137
        %s278 = sand.u32 %s127, 1
        %s279 = scalar_lea.sflag [#allocation4], %s278
        %s280 = sand.u32 %s127, 1
        %s281 = smul.addr %s280, 192
        %s282 = scalar_lea.vmem [#allocation10], %s281
        %s283 = smul.u32 4, %s25
        %s284 = smul.u32 4, %s25
        %s285 = smul.u32 4, %s25
        %v286 = vld [vmem:[%s236] sm:$0xff]
        %v287 = vld [vmem:[%s236 + $0x8] sm:$0xff]
        %v288 = vld [vmem:[%s236 + $0x10] sm:$0xff]
        %v289 = vld [vmem:[%s236 + $0x18] sm:$0xff]
        %v290 = vld [vmem:[%s236 + $0x20] sm:$0xff]
        %v291 = vld [vmem:[%s236 + $0x28] sm:$0xff]
        %v292 = vld [vmem:[%s236 + $0x30] sm:$0xff]
        %v293 = vld [vmem:[%s236 + $0x38] sm:$0xff]
        %v294 = vld [vmem:[%s236 + $0x40] sm:$0xff]
        %v295 = vld [vmem:[%s236 + $0x48] sm:$0xff]
        %v296 = vld [vmem:[%s236 + $0x50] sm:$0xff]
        %v297 = vld [vmem:[%s236 + $0x58] sm:$0xff]
        %v298 = vld [vmem:[%s236 + $0x60] sm:$0xff]
        %v299 = vld [vmem:[%s236 + $0x68] sm:$0xff]
        %v300 = vld [vmem:[%s236 + $0x70] sm:$0xff]
        %v301 = vld [vmem:[%s236 + $0x78] sm:$0xff]
        %v302 = vld [vmem:[%s236 + $0x80] sm:$0xff]
        %v303 = vld [vmem:[%s236 + $0x88] sm:$0xff]
        %v304 = vld [vmem:[%s236 + $0x90] sm:$0xff]
        %v305 = vld [vmem:[%s236 + $0x98] sm:$0xff]
        %v306 = vld [vmem:[%s236 + $0xa0] sm:$0xff]
        %v307 = vld [vmem:[%s236 + $0xa8] sm:$0xff]
        %v308 = vld [vmem:[%s236 + $0xb0] sm:$0xff]
        %v309 = vld [vmem:[%s236 + $0xb8] sm:$0xff]
        %v310 = vld [vmem:[%s245] sm:$0xff]
        %v311 = vld [vmem:[%s245 + $0x8] sm:$0xff]
        %v312 = vld [vmem:[%s245 + $0x10] sm:$0xff]
        %v313 = vld [vmem:[%s245 + $0x18] sm:$0xff]
        %v314 = vld [vmem:[%s245 + $0x20] sm:$0xff]
        %v315 = vld [vmem:[%s245 + $0x28] sm:$0xff]
        %v316 = vld [vmem:[%s245 + $0x30] sm:$0xff]
        %v317 = vld [vmem:[%s245 + $0x38] sm:$0xff]
        %v318 = vld [vmem:[%s245 + $0x40] sm:$0xff]
        %v319 = vld [vmem:[%s245 + $0x48] sm:$0xff]
        %v320 = vld [vmem:[%s245 + $0x50] sm:$0xff]
        %v321 = vld [vmem:[%s245 + $0x58] sm:$0xff]
        %v322 = vld [vmem:[%s245 + $0x60] sm:$0xff]
        %v323 = vld [vmem:[%s245 + $0x68] sm:$0xff]
        %v324 = vld [vmem:[%s245 + $0x70] sm:$0xff]
        %v325 = vld [vmem:[%s245 + $0x78] sm:$0xff]
        %v326 = vld [vmem:[%s245 + $0x80] sm:$0xff]
        %v327 = vld [vmem:[%s245 + $0x88] sm:$0xff]
        %v328 = vld [vmem:[%s245 + $0x90] sm:$0xff]
        %v329 = vld [vmem:[%s245 + $0x98] sm:$0xff]
        %v330 = vld [vmem:[%s245 + $0xa0] sm:$0xff]
        %v331 = vld [vmem:[%s245 + $0xa8] sm:$0xff]
        %v332 = vld [vmem:[%s245 + $0xb0] sm:$0xff]
        %v333 = vld [vmem:[%s245 + $0xb8] sm:$0xff]
        %v334 = vld [vmem:[#allocation7] sm:$0x3f]
        %v336 = vlaneseq
        %v337 = vshrl.u32 %v336, 7
        %v338 = vsub.s32 0, %v337
        %v339 = vrot.slane %v334, %v338
        %v340 = vlaneseq
        %v341 = vshrl.u32 %v340, 7
        %v342 = vsub.s32 1, %v341
        %v343 = vrot.slane %v334, %v342
        %v344 = vlaneseq
        %v345 = vshrl.u32 %v344, 7
        %v346 = vsub.s32 2, %v345
        %v347 = vrot.slane %v334, %v346
        %v348 = vlaneseq
        %v349 = vshrl.u32 %v348, 7
        %v350 = vsub.s32 3, %v349
        %v351 = vrot.slane %v334, %v350
        %v352 = vlaneseq
        %v353 = vshrl.u32 %v352, 7
        %v354 = vsub.s32 4, %v353
        %v355 = vrot.slane %v334, %v354
        %v356 = vlaneseq
        %v357 = vshrl.u32 %v356, 7
        %v358 = vsub.s32 5, %v357
        %v359 = vrot.slane %v334, %v358
        %v366 = vmul.f32 %v286, %v339
        %v367 = vmul.f32 %v287, %v343
        %v368 = vmul.f32 %v288, %v347
        %v369 = vmul.f32 %v289, %v351
        %v370 = vmul.f32 %v290, %v355
        %v371 = vmul.f32 %v291, %v359
        %v372 = vmul.f32 %v292, %v339
        %v373 = vmul.f32 %v293, %v343
        %v374 = vmul.f32 %v294, %v347
        %v375 = vmul.f32 %v295, %v351
        %v376 = vmul.f32 %v296, %v355
        %v377 = vmul.f32 %v297, %v359
        %v378 = vmul.f32 %v298, %v339
        %v379 = vmul.f32 %v299, %v343
        %v380 = vmul.f32 %v300, %v347
        %v381 = vmul.f32 %v301, %v351
        %v382 = vmul.f32 %v302, %v355
        %v383 = vmul.f32 %v303, %v359
        %v384 = vmul.f32 %v304, %v339
        %v385 = vmul.f32 %v305, %v343
        %v386 = vmul.f32 %v306, %v347
        %v387 = vmul.f32 %v307, %v351
        %v388 = vmul.f32 %v308, %v355
        %v389 = vmul.f32 %v309, %v359
        %v390 = vld [vmem:[#allocation8] sm:$0x3f]
        %v392 = vlaneseq
        %v393 = vshrl.u32 %v392, 7
        %v394 = vsub.s32 0, %v393
        %v395 = vrot.slane %v390, %v394
        %v396 = vlaneseq
        %v397 = vshrl.u32 %v396, 7
        %v398 = vsub.s32 1, %v397
        %v399 = vrot.slane %v390, %v398
        %v400 = vlaneseq
        %v401 = vshrl.u32 %v400, 7
        %v402 = vsub.s32 2, %v401
        %v403 = vrot.slane %v390, %v402
        %v404 = vlaneseq
        %v405 = vshrl.u32 %v404, 7
        %v406 = vsub.s32 3, %v405
        %v407 = vrot.slane %v390, %v406
        %v408 = vlaneseq
        %v409 = vshrl.u32 %v408, 7
        %v410 = vsub.s32 4, %v409
        %v411 = vrot.slane %v390, %v410
        %v412 = vlaneseq
        %v413 = vshrl.u32 %v412, 7
        %v414 = vsub.s32 5, %v413
        %v415 = vrot.slane %v390, %v414
        %v422 = vmul.f32 %v310, %v395
        %v423 = vmul.f32 %v311, %v399
        %v424 = vmul.f32 %v312, %v403
        %v425 = vmul.f32 %v313, %v407
        %v426 = vmul.f32 %v314, %v411
        %v427 = vmul.f32 %v315, %v415
        %v428 = vmul.f32 %v316, %v395
        %v429 = vmul.f32 %v317, %v399
        %v430 = vmul.f32 %v318, %v403
        %v431 = vmul.f32 %v319, %v407
        %v432 = vmul.f32 %v320, %v411
        %v433 = vmul.f32 %v321, %v415
        %v434 = vmul.f32 %v322, %v395
        %v435 = vmul.f32 %v323, %v399
        %v436 = vmul.f32 %v324, %v403
        %v437 = vmul.f32 %v325, %v407
        %v438 = vmul.f32 %v326, %v411
        %v439 = vmul.f32 %v327, %v415
        %v440 = vmul.f32 %v328, %v395
        %v441 = vmul.f32 %v329, %v399
        %v442 = vmul.f32 %v330, %v403
        %v443 = vmul.f32 %v331, %v407
        %v444 = vmul.f32 %v332, %v411
        %v445 = vmul.f32 %v333, %v415
        %v446 = vadd.f32 %v366, %v422
        %v447 = vadd.f32 %v367, %v423
        %v448 = vadd.f32 %v368, %v424
        %v449 = vadd.f32 %v369, %v425
        %v450 = vadd.f32 %v370, %v426
        %v451 = vadd.f32 %v371, %v427
        %v452 = vadd.f32 %v372, %v428
        %v453 = vadd.f32 %v373, %v429
        %v454 = vadd.f32 %v374, %v430
        %v455 = vadd.f32 %v375, %v431
        %v456 = vadd.f32 %v376, %v432
        %v457 = vadd.f32 %v377, %v433
        %v458 = vadd.f32 %v378, %v434
        %v459 = vadd.f32 %v379, %v435
        %v460 = vadd.f32 %v380, %v436
        %v461 = vadd.f32 %v381, %v437
        %v462 = vadd.f32 %v382, %v438
        %v463 = vadd.f32 %v383, %v439
        %v464 = vadd.f32 %v384, %v440
        %v465 = vadd.f32 %v385, %v441
        %v466 = vadd.f32 %v386, %v442
        %v467 = vadd.f32 %v387, %v443
        %v468 = vadd.f32 %v388, %v444
        %v469 = vadd.f32 %v389, %v445
        %470 = vst [vmem:[%s282] sm:$0xff] %v446
        %471 = vst [vmem:[%s282 + $0x8] sm:$0xff] %v447
        %472 = vst [vmem:[%s282 + $0x10] sm:$0xff] %v448
        %473 = vst [vmem:[%s282 + $0x18] sm:$0xff] %v449
        %474 = vst [vmem:[%s282 + $0x20] sm:$0xff] %v450
        %475 = vst [vmem:[%s282 + $0x28] sm:$0xff] %v451
        %476 = vst [vmem:[%s282 + $0x30] sm:$0xff] %v452
        %477 = vst [vmem:[%s282 + $0x38] sm:$0xff] %v453
        %478 = vst [vmem:[%s282 + $0x40] sm:$0xff] %v454
        %479 = vst [vmem:[%s282 + $0x48] sm:$0xff] %v455
        %480 = vst [vmem:[%s282 + $0x50] sm:$0xff] %v456
        %481 = vst [vmem:[%s282 + $0x58] sm:$0xff] %v457
        %482 = vst [vmem:[%s282 + $0x60] sm:$0xff] %v458
        %483 = vst [vmem:[%s282 + $0x68] sm:$0xff] %v459
        %484 = vst [vmem:[%s282 + $0x70] sm:$0xff] %v460
        %485 = vst [vmem:[%s282 + $0x78] sm:$0xff] %v461
        %486 = vst [vmem:[%s282 + $0x80] sm:$0xff] %v462
        %487 = vst [vmem:[%s282 + $0x88] sm:$0xff] %v463
        %488 = vst [vmem:[%s282 + $0x90] sm:$0xff] %v464
        %489 = vst [vmem:[%s282 + $0x98] sm:$0xff] %v465
        %490 = vst [vmem:[%s282 + $0xa0] sm:$0xff] %v466
        %491 = vst [vmem:[%s282 + $0xa8] sm:$0xff] %v467
        %492 = vst [vmem:[%s282 + $0xb0] sm:$0xff] %v468
        %493 = vst [vmem:[%s282 + $0xb8] sm:$0xff] %v469
        %s494 = sand.u32 %s127, 1
        %s495 = scalar_lea.sflag [#allocation4], %s494
        %s496 = sand.u32 %s127, 1
        %s497 = smul.addr %s496, 192
        %s498 = scalar_lea.vmem [#allocation10], %s497
        // Predicated region
        $region53: #{tpu_custom_call.1} parent=35 // pred_check
          %p499 = pneg %p137
        $region54: #{tpu_custom_call.1} parent=35 // pred_check_branch
          %501 = sbr.rel (%p499) target = $region56
        $region55: #{tpu_custom_call.1} parent=35 // pred_region
          %s502 = smul.u32 4, %s25
          %s504 = ssub.s32 3072, 3072
          %505 = vsyncadd %s495, %s504
          %s506 = smul.addr %s502, 6
          %s507 = smul.addr %s506, 128
          %s508 = scalar_lea.hbm %s4, %s507
          %s509 = sshll.u32 %s498, 4
          %s510 = int_to_ptr.vmem [resolvable:$true] %s509
          %515 = dma.vmem_to_hbm [thread:$0]  %s510, 3072, %s508, %s495, 768, 768, 48
        $region56: #{tpu_custom_call.1} parent=35 // pred_fallthru
          _
      $region36: #{tpu_custom_call.1} parent=5 // pred_fallthru
        _
      %p516 = scmp.le.s32.totalorder 2, %s20
      // Predicated region
      $region57: #{tpu_custom_call.1} parent=5 // pred_check
        %p517 = pneg %p516
      $region58: #{tpu_custom_call.1} parent=5 // pred_check_branch
        %519 = sbr.rel (%p517) target = $region60
      $region59: #{tpu_custom_call.1} parent=5 // pred_region
        %s520 = ssub.s32 %s20, 2
        // Predicated region
        $region61: #{tpu_custom_call.1} parent=59 // pred_check
          %p521 = pneg %p143
        $region62: #{tpu_custom_call.1} parent=59 // pred_check_branch
          %523 = sbr.rel (%p521) target = $region64
        $region63: #{tpu_custom_call.1} parent=59 // pred_region
          %s524 = sand.u32 %s128, 1
          %s525 = scalar_lea.sflag [#allocation4], %s524
          %s526 = sand.u32 %s128, 1
          %s527 = smul.addr %s526, 192
          %s528 = scalar_lea.vmem [#allocation10], %s527
          %529 = dma.done %s525, 3072
        $region64: #{tpu_custom_call.1} parent=59 // pred_fallthru
          _
      $region60: #{tpu_custom_call.1} parent=5 // pred_fallthru
        _
    $region6: #{tpu_custom_call.1} parent=1 // loop_footer
      %s24 = sadd.s32 1, %s20
    $region7: #{tpu_custom_call.1} parent=1 // loop_footer_branch
      %19 = sbr.rel target = $region3
    $region8: #{tpu_custom_call.1} parent=1 // loop_exit
      _
    %530 = vsyncpa [#allocation3], 1
    %s531 = scalar_lea.sflag [#allocation3], 1
    %532 = vsyncpa %s531, 1
    %533 = vsyncpa [#allocation6], 1
    %s534 = scalar_lea.sflag [#allocation6], 1
    %535 = vsyncpa %s534, 1
    %536 = vsyncpa [#allocation9], 1
    %537 = vsyncpa [#allocation4], 1
    %s538 = scalar_lea.sflag [#allocation4], 1
    %539 = vsyncpa %s538, 1

</llo_original>
